<compile_context>
chip_gen: v7x
topology: tpu7x:2x2x1
jax: 0.10.0
libtpu: 0.0.40
codegen_flags: <defaults>
</compile_context>

<pallas_src>
import functools

import jax
import jax.numpy as jnp
from jax.experimental import pallas as pl
from jax.experimental.pallas import tpu as pltpu

_TINY = 1e-30


def _polar_kernel(re_ref, im_ref, out_re_ref, out_im_ref, *,
                  act_mag, act_phase, mag_act_zero_fixed):
    re = re_ref[...].astype(jnp.float32)
    im = im_ref[...].astype(jnp.float32)

    sq = re * re + im * im                      # |z|^2
    inv_mag = jax.lax.rsqrt(sq + _TINY)         # single EUP rsqrt (no divide, no sqrt)
    mag = sq * inv_mag                          # |z|
    g_mag = act_mag(mag)                        # G_mag(|z|)

    if act_phase is None:
        # exp(j*angle(z)) == (re/|z|, im/|z|)
        if mag_act_zero_fixed:
            # G_mag(0) == 0  => z == 0 maps to 0 + 0j without any selects.
            scale = g_mag * inv_mag
            out_re = re * scale
            out_im = im * scale
        else:
            # General G_mag: torch.angle(0) == 0 -> exp(j*0) == 1 + 0j.
            nonzero = sq > 0.0
            scale = g_mag * inv_mag
            out_re = jnp.where(nonzero, re * scale, g_mag)
            out_im = jnp.where(nonzero, im * scale, 0.0)
    else:
        phase = act_phase(jnp.arctan2(im, re))  # G_phase(angle(z))
        out_re = g_mag * jnp.cos(phase)
        out_im = g_mag * jnp.sin(phase)

    out_re_ref[...] = out_re.astype(out_re_ref.dtype)
    out_im_ref[...] = out_im.astype(out_im_ref.dtype)


def _mag_act_maps_zero_to_zero(act_mag):
    """True iff act_mag(0) == 0 can be proven at trace time (enables select-free path)."""
    try:
        return float(act_mag(jnp.zeros((), jnp.float32))) == 0.0
    except Exception:
        return False  # can't prove it (e.g. traced closure) -> use the general path


def generalized_polar_activation(z_re, z_im, *, act_mag=jnp.tanh, act_phase=None,
                                 block_elems=512 * 1024, max_lanes=1024):
    """Applies G_mag(|z|) * exp(j * G_phase(angle(z))) elementwise.

    z_re, z_im: real/imag planes of the complex input, any shape, f32/bf16/fp16.
    Returns (out_re, out_im) with the same shape/dtype (math is done in f32 in VMEM).
    """
    assert z_re.shape == z_im.shape and z_re.dtype == z_im.dtype
    orig_shape = z_re.shape
    dtype = z_re.dtype
    total = z_re.size
    if total == 0:
        return z_re, z_im

    # Slab width: the largest 128-multiple (<= max_lanes) dividing `total`, so the
    # flatten/reshape is free (no pad copy, no output slice copy).
    L = None
    for cand in (max_lanes, 512, 256, 128):
        if total % cand == 0:
            L = cand
            break
    needs_pad = L is None
    if needs_pad:
        # TODO(synk): rare fallback (total not a multiple of 128) re-introduces one pad
        # copy + one slice copy; removable with a scalar-prefetched valid count + masked
        # pltpu.store if it ever matters.
        L = 128

    re_flat = z_re.reshape(-1)
    im_flat = z_im.reshape(-1)
    if needs_pad:
        padded_total = pl.cdiv(total, L) * L
        pad = padded_total - total
        re_flat = jnp.pad(re_flat, (0, pad))
        im_flat = jnp.pad(im_flat, (0, pad))
    else:
        padded_total = total

    rows = padded_total // L
    re2 = re_flat.reshape(rows, L)
    im2 = im_flat.reshape(rows, L)

    # Row-block size: ~block_elems elements per stream per step (~2 MiB f32), clamped so
    # the grid has >= ~4 steps when the tensor is big enough (keeps both v7x TCs busy).
    tr = max(8, (block_elems // L) // 8 * 8)
    if rows >= 32:
        tr_cap = max(8, (rows // 4) // 8 * 8)
        tr = min(tr, tr_cap)
    else:
        tr = rows  # single block; equal-to-full-dim satisfies the (8,128) rule
    grid = (pl.cdiv(rows, tr),)  # ragged last block handled by Pallas (OOB writes dropped)

    mag_zero_fixed = (act_phase is None) and _mag_act_maps_zero_to_zero(act_mag)
    kernel = functools.partial(
        _polar_kernel,
        act_mag=act_mag,
        act_phase=act_phase,
        mag_act_zero_fixed=mag_zero_fixed,
    )

    spec = pl.BlockSpec((tr, L), lambda i: (i, 0))
    out_re, out_im = pl.pallas_call(
        kernel,
        out_shape=(
            jax.ShapeDtypeStruct((rows, L), dtype),
            jax.ShapeDtypeStruct((rows, L), dtype),
        ),
        grid=grid,
        in_specs=[spec, spec],
        out_specs=(spec, spec),
        compiler_params=pltpu.CompilerParams(
            dimension_semantics=("parallel",),     # shards row-blocks across TCs on v7x
            vmem_limit_bytes=48 * 1024 * 1024,     # headroom for 2 MiB/stream double-buffered
        ),
    )(re2, im2)

    if needs_pad:
        out_re = out_re.reshape(-1)[:total]
        out_im = out_im.reshape(-1)[:total]
    return out_re.reshape(orig_shape), out_im.reshape(orig_shape)


if __name__ == "__main__":
    key = jax.random.PRNGKey(0)
    k_re, k_im = jax.random.split(key)

    N, C, H, W = 2, 4, 16, 16  # NCHW, matching the PyTorch convention
    z_re = jax.random.normal(k_re, (N, C, H, W), dtype=jnp.float32)
    z_im = jax.random.normal(k_im, (N, C, H, W), dtype=jnp.float32)

    out_re, out_im = generalized_polar_activation(z_re, z_im,
                                                  act_mag=jnp.tanh,
                                                  act_phase=None)
    out_re = jax.block_until_ready(out_re)
    out_im = jax.block_until_ready(out_im)

    # Pure-JAX complex reference: G(z) = tanh(|z|) * exp(j * angle(z))
    z = z_re.astype(jnp.complex64) + 1j * z_im.astype(jnp.complex64)
    ref = jnp.tanh(jnp.abs(z)) * jnp.exp(1j * jnp.angle(z))
    assert jnp.allclose(out_re, jnp.real(ref), atol=1e-5, rtol=1e-5)
    assert jnp.allclose(out_im, jnp.imag(ref), atol=1e-5, rtol=1e-5)

    # bf16 I/O path (HBM dtype narrowed, math still f32 in VMEM).
    zb_re = z_re.astype(jnp.bfloat16)
    zb_im = z_im.astype(jnp.bfloat16)
    ob_re, ob_im = generalized_polar_activation(zb_re, zb_im,
                                                act_mag=jnp.tanh,
                                                act_phase=None)
    ob_re = jax.block_until_ready(ob_re)
    ob_im = jax.block_until_ready(ob_im)
    zb = zb_re.astype(jnp.complex64) + 1j * zb_im.astype(jnp.complex64)
    refb = jnp.tanh(jnp.abs(zb)) * jnp.exp(1j * jnp.angle(zb))
    assert jnp.allclose(ob_re.astype(jnp.float32), jnp.real(refb), atol=1e-2, rtol=1e-2)
    assert jnp.allclose(ob_im.astype(jnp.float32), jnp.imag(refb), atol=1e-2, rtol=1e-2)

    print("KERNEL_OK")
</pallas_src>

<mosaic_0001>
module attributes {stable_mosaic.version = 11 : i64} {
  func.func @_polar_kernel(%arg0: i32, %arg1: memref<2x1024xf32, #tpu.memory_space<vmem>>, %arg2: memref<2x1024xf32, #tpu.memory_space<vmem>>, %arg3: memref<2x1024xf32, #tpu.memory_space<vmem>>, %arg4: memref<2x1024xf32, #tpu.memory_space<vmem>>) attributes {dimension_semantics = [#tpu.dimension_semantics<parallel>], iteration_bounds = array<i64: 1>, scalar_prefetch = 0 : i64, scratch_operands = 0 : i64, tpu.core_type = #tpu.core_type<tc>, window_params = [{transform_indices = @transform_0, window_bounds = array<i64: 2, 1024>}, {transform_indices = @transform_1, window_bounds = array<i64: 2, 1024>}, {transform_indices = @transform_2, window_bounds = array<i64: 2, 1024>}, {transform_indices = @transform_3, window_bounds = array<i64: 2, 1024>}]} {
    %c0 = arith.constant 0 : index
    %c0_0 = arith.constant 0 : index
    %0 = vector.load %arg1[%c0, %c0_0] : memref<2x1024xf32, #tpu.memory_space<vmem>>, vector<2x1024xf32>
    %c0_1 = arith.constant 0 : index
    %c0_2 = arith.constant 0 : index
    %1 = vector.load %arg2[%c0_1, %c0_2] : memref<2x1024xf32, #tpu.memory_space<vmem>>, vector<2x1024xf32>
    %2 = arith.mulf %0, %0 : vector<2x1024xf32>
    %3 = arith.mulf %1, %1 : vector<2x1024xf32>
    %4 = arith.addf %2, %3 : vector<2x1024xf32>
    %cst = arith.constant 1.000000e-30 : f32
    %5 = vector.broadcast %cst : f32 to vector<2x1024xf32>
    %6 = arith.addf %4, %5 : vector<2x1024xf32>
    %7 = math.rsqrt %6 : vector<2x1024xf32>
    %8 = arith.mulf %4, %7 : vector<2x1024xf32>
    %9 = math.tanh %8 : vector<2x1024xf32>
    %10 = arith.mulf %9, %7 : vector<2x1024xf32>
    %11 = arith.mulf %0, %10 : vector<2x1024xf32>
    %12 = arith.mulf %1, %10 : vector<2x1024xf32>
    %c0_3 = arith.constant 0 : index
    %c0_4 = arith.constant 0 : index
    %13 = vector.load %arg3[%c0_3, %c0_4] : memref<2x1024xf32, #tpu.memory_space<vmem>>, vector<2x1024xf32>
    tpu.vector_store %arg3[%c0_3, %c0_4], %11 {strides = array<i32>} : memref<2x1024xf32, #tpu.memory_space<vmem>>, vector<2x1024xf32>,
    %c0_5 = arith.constant 0 : index
    %c0_6 = arith.constant 0 : index
    %14 = vector.load %arg4[%c0_5, %c0_6] : memref<2x1024xf32, #tpu.memory_space<vmem>>, vector<2x1024xf32>
    tpu.vector_store %arg4[%c0_5, %c0_6], %12 {strides = array<i32>} : memref<2x1024xf32, #tpu.memory_space<vmem>>, vector<2x1024xf32>,
    return
  }
  func.func @transform_0(%arg0: i32) -> (i32, i32) {
    %c0_i32 = arith.constant 0 : i32
    %c0_i32_0 = arith.constant 0 : i32
    return %arg0, %c0_i32 : i32, i32
  }
  func.func @transform_1(%arg0: i32) -> (i32, i32) {
    %c0_i32 = arith.constant 0 : i32
    %c0_i32_0 = arith.constant 0 : i32
    return %arg0, %c0_i32 : i32, i32
  }
  func.func @transform_2(%arg0: i32) -> (i32, i32) {
    %c0_i32 = arith.constant 0 : i32
    %c0_i32_0 = arith.constant 0 : i32
    return %arg0, %c0_i32 : i32, i32
  }
  func.func @transform_3(%arg0: i32) -> (i32, i32) {
    %c0_i32 = arith.constant 0 : i32
    %c0_i32_0 = arith.constant 0 : i32
    return %arg0, %c0_i32 : i32, i32
  }
}

</mosaic_0001>

<llo_original>
// kernel: tpu_custom_call.1
$region0: #{tpu_custom_call.1}
  #allocation0 [shape = 'u32[]', space=smem, size = 0x4, offset = 0x4, fixed_abs, tag = 'smem constant byte address 0x4 - core index']
  #allocation1 [shape = 'u32[144,128]{1,0:T(1,128)}', space=vmem, size = 0x12000, scoped, tag = 'internal scratch']
  %s0 = inlined_call_operand.hbm [shape: f32[2,1024], index: 0, kind: input, shape index: {}]
  %s1 = inlined_call_operand.hbm [shape: f32[2,1024], index: 1, kind: input, shape index: {}]
  %s2 = inlined_call_operand.hbm [shape: f32[2,1024], index: 2, kind: output, shape index: {0}]
  %s3 = inlined_call_operand.hbm [shape: f32[2,1024], index: 3, kind: output, shape index: {1}]
  %4 = xla_tuple %s2, %s3
  %s5 = sld [smem:[#allocation0]]
  $region34: #{tpu_custom_call.1} parent=0
    _
  %s7 = ssub.s32 1, %s5
  %s8 = scalar_select 0, %s7, %s5
  $region1: #{tpu_custom_call.1} parent=0
    #allocation2 [shape = 'u8[8192]{0}', space=vmem, size = 0x2000, scoped, tag = 'input window, operand 0, single buffered']
    #allocation3 [shape = 's32[1]{0}', space=sflag, size = 0x4, scoped, tag = 'scoped memory for tpu_custom_call.1']
    #allocation4 [shape = 's32[1]{0}', space=sflag, size = 0x4, scoped, tag = 'scoped memory for tpu_custom_call.1']
    #allocation5 [shape = 'u8[8192]{0}', space=vmem, size = 0x2000, scoped, tag = 'input window, operand 1, single buffered']
    #allocation6 [shape = 's32[1]{0}', space=sflag, size = 0x4, scoped, tag = 'scoped memory for tpu_custom_call.1']
    #allocation7 [shape = 'u8[8192]{0}', space=vmem, size = 0x2000, scoped, tag = 'output window, operand 0, single buffered']
    #allocation8 [shape = 'u8[8192]{0}', space=vmem, size = 0x2000, scoped, tag = 'output window, operand 1, single buffered']
    #allocation9 [shape = 's32[1]{0}', space=sflag, size = 0x4, scoped, tag = 'scoped memory for tpu_custom_call.1']
    %9 = vsyncpa [#allocation3], 0
    %10 = vsyncpa [#allocation6], 0
    %11 = vsyncpa [#allocation4], 0
    %12 = vsyncpa [#allocation9], 0
    // Predicated region
    $region2: #{tpu_custom_call.1} parent=1 // pred_check
      _
    $region3: #{tpu_custom_call.1} parent=1 // pred_check_branch
      %14 = sbr.rel (0) target = $region5
    $region4: #{tpu_custom_call.1} parent=1 // pred_region
      %s16 = ssub.s32 256, 256
      %17 = vsyncadd [#allocation3], %s16
      %s19 = sshll.u32 [#allocation2], 4
      %s20 = int_to_ptr.vmem [resolvable:$true] %s19
      %22 = dma.hbm_to_vmem [thread:$0]  %s0, 256, %s20, [#allocation3]
    $region5: #{tpu_custom_call.1} parent=1 // pred_fallthru
      _
    // Predicated region
    $region6: #{tpu_custom_call.1} parent=1 // pred_check
      _
    $region7: #{tpu_custom_call.1} parent=1 // pred_check_branch
      %24 = sbr.rel (0) target = $region9
    $region8: #{tpu_custom_call.1} parent=1 // pred_region
      %s26 = ssub.s32 256, 256
      %27 = vsyncadd [#allocation6], %s26
      %s29 = sshll.u32 [#allocation5], 4
      %s30 = int_to_ptr.vmem [resolvable:$true] %s29
      %32 = dma.hbm_to_vmem [thread:$0]  %s1, 256, %s30, [#allocation6]
    $region9: #{tpu_custom_call.1} parent=1 // pred_fallthru
      _
    // Predicated region
    $region10: #{tpu_custom_call.1} parent=1 // pred_check
      _
    $region11: #{tpu_custom_call.1} parent=1 // pred_check_branch
      %34 = sbr.rel (0) target = $region13
    $region12: #{tpu_custom_call.1} parent=1 // pred_region
      %35 = dma.done [#allocation3], 256
    $region13: #{tpu_custom_call.1} parent=1 // pred_fallthru
      _
    // Predicated region
    $region14: #{tpu_custom_call.1} parent=1 // pred_check
      _
    $region15: #{tpu_custom_call.1} parent=1 // pred_check_branch
      %37 = sbr.rel (0) target = $region17
    $region16: #{tpu_custom_call.1} parent=1 // pred_region
      %38 = dma.done [#allocation6], 256
    $region17: #{tpu_custom_call.1} parent=1 // pred_fallthru
      _
    %v39 = vld [vmem:[#allocation2] sm:$0xff]
    %v40 = vld [vmem:[#allocation2 + $0x8] sm:$0xff]
    %v41 = vld [vmem:[#allocation5] sm:$0xff]
    %v42 = vld [vmem:[#allocation5 + $0x8] sm:$0xff]
    %v43 = vmul.f32 %v39, %v39
    %v44 = vmul.f32 %v40, %v40
    %v45 = vmul.f32 %v41, %v41
    %v46 = vmul.f32 %v42, %v42
    %v47 = vadd.f32 %v43, %v45
    %v48 = vadd.f32 %v44, %v46
    %v49 = vadd.f32 %v47, 1e-30
    %v50 = vadd.f32 %v48, 1e-30
    %v51 = vrsqrt.pop %v49
    %v52 = vrsqrt.pop %v50
    %v53 = vmul.f32 %v47, %v51
    %v54 = vmul.f32 %v48, %v52
    %v55 = vtanh.pop %v53
    %v56 = vtanh.pop %v54
    %v57 = vmul.f32 %v55, %v51
    %v58 = vmul.f32 %v56, %v52
    %v59 = vmul.f32 %v39, %v57
    %v60 = vmul.f32 %v40, %v58
    %v61 = vmul.f32 %v41, %v57
    %v62 = vmul.f32 %v42, %v58
    %63 = vst [vmem:[#allocation7] sm:$0xff] %v59
    %64 = vst [vmem:[#allocation7 + $0x8] sm:$0xff] %v60
    %65 = vst [vmem:[#allocation8] sm:$0xff] %v61
    %66 = vst [vmem:[#allocation8 + $0x8] sm:$0xff] %v62
    // Predicated region
    $region18: #{tpu_custom_call.1} parent=1 // pred_check
      _
    $region19: #{tpu_custom_call.1} parent=1 // pred_check_branch
      %68 = sbr.rel (0) target = $region21
    $region20: #{tpu_custom_call.1} parent=1 // pred_region
      %s70 = ssub.s32 256, 256
      %71 = vsyncadd [#allocation4], %s70
      %s73 = sshll.u32 [#allocation7], 4
      %s74 = int_to_ptr.vmem [resolvable:$true] %s73
      %76 = dma.vmem_to_hbm [thread:$0]  %s74, 256, %s2, [#allocation4]
    $region21: #{tpu_custom_call.1} parent=1 // pred_fallthru
      _
    // Predicated region
    $region22: #{tpu_custom_call.1} parent=1 // pred_check
      _
    $region23: #{tpu_custom_call.1} parent=1 // pred_check_branch
      %78 = sbr.rel (0) target = $region25
    $region24: #{tpu_custom_call.1} parent=1 // pred_region
      %s80 = ssub.s32 256, 256
      %81 = vsyncadd [#allocation9], %s80
      %s83 = sshll.u32 [#allocation8], 4
      %s84 = int_to_ptr.vmem [resolvable:$true] %s83
      %86 = dma.vmem_to_hbm [thread:$0]  %s84, 256, %s3, [#allocation9]
    $region25: #{tpu_custom_call.1} parent=1 // pred_fallthru
      _
    // Predicated region
    $region26: #{tpu_custom_call.1} parent=1 // pred_check
      _
    $region27: #{tpu_custom_call.1} parent=1 // pred_check_branch
      %88 = sbr.rel (0) target = $region29
    $region28: #{tpu_custom_call.1} parent=1 // pred_region
      %89 = dma.done [#allocation4], 256
    $region29: #{tpu_custom_call.1} parent=1 // pred_fallthru
      _
    // Predicated region
    $region30: #{tpu_custom_call.1} parent=1 // pred_check
      _
    $region31: #{tpu_custom_call.1} parent=1 // pred_check_branch
      %91 = sbr.rel (0) target = $region33
    $region32: #{tpu_custom_call.1} parent=1 // pred_region
      %92 = dma.done [#allocation9], 256
    $region33: #{tpu_custom_call.1} parent=1 // pred_fallthru
      _
    %93 = vsyncpa [#allocation3], 1
    %94 = vsyncpa [#allocation6], 1
    %95 = vsyncpa [#allocation4], 1
    %96 = vsyncpa [#allocation9], 1

</llo_original>
